<compile_context>
chip_gen: v5e
topology: v5e:2x2
jax: 0.10.0
libtpu: 0.0.40
codegen_flags: <defaults>
</compile_context>

<pallas_src>
import functools

import jax
import jax.numpy as jnp
from jax import lax
from jax.experimental import pallas as pl
from jax.experimental.pallas import tpu as pltpu
import numpy as np


@functools.lru_cache(maxsize=None)
def _roll_is_jnp_convention():
    """One-time hardware probe pinning pltpu.roll's shift-sign convention.

    Returns True if pltpu.roll(x, s, axis) == jnp.roll(x, s, axis) on this
    backend, False if the sign is flipped.  Runs a trivial whole-array kernel
    once; result is cached for the process lifetime.
    """
    def probe(x_ref, o_ref):
        o_ref[...] = pltpu.roll(x_ref[...], 1, axis=1)

    with jax.ensure_compile_time_eval():
        x = jnp.arange(8 * 128, dtype=jnp.float32).reshape(8, 128)
        y = pl.pallas_call(
            probe, out_shape=jax.ShapeDtypeStruct((8, 128), jnp.float32))(x)
        y = np.asarray(y)
        xr = np.asarray(x)
    if np.array_equal(y, np.roll(xr, 1, axis=1)):
        return True
    if np.array_equal(y, np.roll(xr, -1, axis=1)):
        return False
    raise RuntimeError("unexpected pltpu.roll semantics")


def _gradient_loss_kernel(col_ref, real_ref, fake_ref, out_ref, *,
                          width, n_images, roll_fwd):
    # real_ref / fake_ref: (nb, C, L) blocks with L = H*W (lane-dense flat
    # layout).  col_ref: (1, L) int32 = flat_index % W, precomputed host-side
    # so no vector integer modulo is needed in-kernel.
    nb, C, L = real_ref.shape
    W = width

    def shift(x, s):
        # output[..., k] = x[..., (k - s) % L]  (jnp.roll semantics); the
        # probe-resolved convention keeps the amount non-negative either way.
        amt = (s if roll_fwd else -s) % L
        return pltpu.roll(x, amt, axis=1)

    # Grayscale *difference* plane.  Linearity: the whole pipeline before the
    # abs() is linear, so mean_c((r+1)/2) - mean_c((f+1)/2) == sum_c(r-f)*0.5/C
    # and the Sobel stencil runs ONCE.  Unrolled per-channel accumulate keeps
    # only one (nb, L) accumulator live; bf16 inputs upcast here.
    acc = (real_ref[:, 0, :].astype(jnp.float32)
           - fake_ref[:, 0, :].astype(jnp.float32))
    for c in range(1, C):
        acc = acc + (real_ref[:, c, :].astype(jnp.float32)
                     - fake_ref[:, c, :].astype(jnp.float32))
    d = acc * jnp.float32(0.5 / C)                       # (nb, L)

    # Boundary masks for the 1-px reflection pad, in flat coordinates.
    col = col_ref[...]                                   # (1, L)
    first_col = col == 0
    last_col = col == W - 1
    flat = lax.broadcasted_iota(jnp.int32, (1, L), 1)    # (1, L)
    first_row = flat < W
    last_row = flat >= L - W

    # Horizontal gradient (torch fh after flips = [1,2,1]^T x [1,0,-1]):
    #   dx[i,j] = p[i, j-1] - p[i, j+1]; reflection makes it exactly 0 on the
    #   first/last column, so edge rolls' wrapped values never matter.
    dx = jnp.where(first_col | last_col, 0.0, shift(d, 1) - shift(d, -1))
    up_dx = shift(dx, W)                                 # row above (wrap on row 0)
    dn_dx = shift(dx, -W)                                # row below (wrap on row H-1)
    gh = 2.0 * dx + jnp.where(first_row, 2.0 * dn_dx,
                              jnp.where(last_row, 2.0 * up_dx, up_dx + dn_dx))

    # Vertical gradient (torch fv after flips = [-1,0,1]^T x [1,2,1]):
    #   dy[i,j] = p[i+1, j] - p[i-1, j]; exactly 0 on the first/last row.
    dy = jnp.where(first_row | last_row, 0.0, shift(d, -W) - shift(d, W))
    lf_dy = shift(dy, 1)
    rt_dy = shift(dy, -1)
    gv = 2.0 * dy + jnp.where(first_col, 2.0 * rt_dy,
                              jnp.where(last_col, 2.0 * lf_dy, lf_dy + rt_dy))

    s = jnp.abs(gh) + jnp.abs(gv)                        # (nb, L)

    # Mask tail images when the batch block does not divide N (the OOB block
    # data is garbage; where() keeps NaNs out of the sum).
    img = pl.program_id(0) * nb + lax.broadcasted_iota(jnp.int32, (nb, 1), 0)
    s = jnp.where(img < n_images, s, 0.0)

    # Lane-dense per-block partial (sublane reduce only); final sum + scale in
    # the wrapper.
    out_ref[...] = jnp.sum(s, axis=0, keepdims=True).reshape(1, 1, L)


def _vmem_limit_bytes():
    """Derive the VMEM limit from the chip (v5e/v6e 128 MiB, v7x 64 MiB)."""
    try:
        cap = int(pltpu.get_tpu_info().vmem_capacity_bytes)
        if cap <= 0:
            cap = 64 << 20
    except Exception:
        cap = 64 << 20          # conservative fallback (v7x physical VMEM)
    return (cap * 3) // 4


def _pick_batch_block(N, C, L, in_itemsize, vmem_limit_bytes):
    """Images per grid step: 2 inputs x 2 pipeline buffers of (nb, C, L) plus
    ~a dozen live (nb, L) f32 stencil temporaries, kept under ~60% of the VMEM
    limit so the compiler has slack for layout scratch."""
    per_image = 4 * C * L * in_itemsize + 12 * L * 4
    budget = (vmem_limit_bytes * 3) // 5
    return max(1, min(N, budget // per_image))


def gradient_loss(real, fake):
    """real, fake: (N, C, H, W) float32 or bfloat16 NCHW.  Returns the scalar
    loss = mean(|sobel_h(gray(real)) - sobel_h(gray(fake))|
                + |sobel_v(gray(real)) - sobel_v(gray(fake))|)."""
    assert real.shape == fake.shape and real.ndim == 4
    N, C, H, W = real.shape
    assert H >= 2 and W >= 2, "reflection pad of 1 needs H, W >= 2"
    L = H * W

    # Lane-dense layout for the bulk C*H*W stream; free metadata reshape in HBM.
    real_f = real.reshape(N, C, L)
    fake_f = fake.reshape(N, C, L)
    col_idx = jnp.asarray((np.arange(L, dtype=np.int32) % W).reshape(1, L))

    vmem_limit = _vmem_limit_bytes()
    nb = _pick_batch_block(N, C, L, real.dtype.itemsize, vmem_limit)
    num_blocks = pl.cdiv(N, nb)
    # TODO(synk): if a single (1, C, H*W) image block ever exceeds the VMEM
    # budget (very large images), switch to halo'd row-strip spatial tiling.

    kernel = functools.partial(
        _gradient_loss_kernel, width=W, n_images=N,
        roll_fwd=_roll_is_jnp_convention())

    partials = pl.pallas_call(
        kernel,
        out_shape=jax.ShapeDtypeStruct((num_blocks, 1, L), jnp.float32),
        grid=(num_blocks,),
        in_specs=[
            pl.BlockSpec((1, L), lambda b: (0, 0)),           # col index (tiny)
            pl.BlockSpec((nb, C, L), lambda b: (b, 0, 0)),    # real
            pl.BlockSpec((nb, C, L), lambda b: (b, 0, 0)),    # fake
        ],
        out_specs=pl.BlockSpec((1, 1, L), lambda b: (b, 0, 0)),
        compiler_params=pltpu.CompilerParams(
            # TODO(synk): on v7x switch this axis to pltpu.CORE_PARALLEL (and
            # consider pipeline_mode=pl.Buffered(3) on the inputs) to engage
            # the second TensorCore; kept "parallel" here for portability.
            dimension_semantics=("parallel",),
            vmem_limit_bytes=int(vmem_limit)),
    )(col_idx, real_f, fake_f)

    # Normalize by the TRUE element count (masked tail images contribute 0).
    return jnp.sum(partials) * jnp.float32(1.0 / (N * H * W))


def _reference_loss(real, fake):
    """Plain-JAX reference replicating the PyTorch module exactly."""
    def grads(x):
        x = (x + 1.0) / 2.0
        x = jnp.mean(x, axis=1, keepdims=True)                       # (N,1,H,W)
        xp = jnp.pad(x, ((0, 0), (0, 0), (1, 1), (1, 1)), mode="reflect")
        fh = jnp.array([[1., 0., -1.], [2., 0., -2.], [1., 0., -1.]],
                       dtype=jnp.float32)[None, None]
        fv = jnp.array([[-1., -2., -1.], [0., 0., 0.], [1., 2., 1.]],
                       dtype=jnp.float32)[None, None]
        gh = lax.conv_general_dilated(xp, fh, (1, 1), "VALID")
        gv = lax.conv_general_dilated(xp, fv, (1, 1), "VALID")
        return gh, gv

    r_gh, r_gv = grads(real)
    f_gh, f_gv = grads(fake)
    return jnp.mean(jnp.abs(r_gh - f_gh) + jnp.abs(r_gv - f_gv))


if __name__ == "__main__":
    key = jax.random.PRNGKey(0)
    k1, k2 = jax.random.split(key)
    N, C, H, W = 2, 4, 16, 16
    real = jax.random.uniform(k1, (N, C, H, W), jnp.float32, -1.0, 1.0)
    fake = jax.random.uniform(k2, (N, C, H, W), jnp.float32, -1.0, 1.0)

    loss = gradient_loss(real, fake)
    jax.block_until_ready(loss)

    ref = _reference_loss(real, fake)
    np.testing.assert_allclose(np.asarray(loss), np.asarray(ref),
                               rtol=1e-5, atol=1e-5)
    print("KERNEL_OK")
</pallas_src>

<mosaic_0001>
module attributes {stable_mosaic.version = 11 : i64} {
  func.func @probe(%arg0: memref<8x128xf32, #tpu.memory_space<vmem>>, %arg1: memref<8x128xf32, #tpu.memory_space<vmem>>) attributes {dimension_semantics = [], scalar_prefetch = 0 : i64, scratch_operands = 0 : i64, tpu.core_type = #tpu.core_type<tc>} {
    %c0 = arith.constant 0 : index
    %c0_0 = arith.constant 0 : index
    %0 = vector.load %arg0[%c0, %c0_0] : memref<8x128xf32, #tpu.memory_space<vmem>>, vector<8x128xf32>
    %c1_i32 = arith.constant 1 : i32
    %1 = tpu.dynamic_rotate %0 by %c1_i32 dim 1 : vector<8x128xf32>, i32 -> vector<8x128xf32>
    %c0_1 = arith.constant 0 : index
    %c0_2 = arith.constant 0 : index
    %2 = vector.load %arg1[%c0_1, %c0_2] : memref<8x128xf32, #tpu.memory_space<vmem>>, vector<8x128xf32>
    tpu.vector_store %arg1[%c0_1, %c0_2], %1 {strides = array<i32>} : memref<8x128xf32, #tpu.memory_space<vmem>>, vector<8x128xf32>,
    return
  }
}

</mosaic_0001>

<llo_original>
// kernel: tpu_custom_call.1
$region0: #{tpu_custom_call.1}
  #allocation0 [shape = 'u32[]', space=smem, size = 0x4, offset = 0x4, fixed_abs, tag = 'smem constant byte address 0x4 - core index']
  #allocation1 [shape = 'u32[72,128]{1,0:T(1,128)}', space=vmem, size = 0x9000, scoped, tag = 'internal scratch']
  %s0 = inlined_call_operand.hbm [shape: f32[8,128], index: 0, kind: input, shape index: {}]
  %s1 = inlined_call_operand.hbm [shape: f32[8,128], index: 1, kind: output, shape index: {}]
  %s2 = sld [smem:[#allocation0]]
  $region18: #{tpu_custom_call.1} parent=0
    _
  %s4 = ssub.s32 1, %s2
  %s5 = scalar_select 0, %s4, %s2
  $region1: #{tpu_custom_call.1} parent=0
    #allocation2 [shape = 'u8[4096]{0}', space=vmem, size = 0x1000, scoped, tag = 'input window, operand 0, single buffered']
    #allocation3 [shape = 's32[1]{0}', space=sflag, size = 0x4, scoped, tag = 'scoped memory for tpu_custom_call.1']
    #allocation4 [shape = 's32[1]{0}', space=sflag, size = 0x4, scoped, tag = 'scoped memory for tpu_custom_call.1']
    #allocation5 [shape = 'u8[4096]{0}', space=vmem, size = 0x1000, scoped, tag = 'output window, operand 0, single buffered']
    %6 = vsyncpa [#allocation3], 0
    %7 = vsyncpa [#allocation4], 0
    // Predicated region
    $region2: #{tpu_custom_call.1} parent=1 // pred_check
      _
    $region3: #{tpu_custom_call.1} parent=1 // pred_check_branch
      %9 = sbr.rel (0) target = $region5
    $region4: #{tpu_custom_call.1} parent=1 // pred_region
      %11 = vsyncadd [#allocation3], 0
      %s13 = sshll.u32 %s0, 4
      %s14 = int_to_ptr.hbm [resolvable:$true] %s13
      %s15 = sshll.u32 [#allocation2], 4
      %s16 = int_to_ptr.vmem [resolvable:$true] %s15
      %18 = dma.hbm_to_vmem [thread:$0]  %s14, 128, %s16, [#allocation3]
    $region5: #{tpu_custom_call.1} parent=1 // pred_fallthru
      _
    // Predicated region
    $region6: #{tpu_custom_call.1} parent=1 // pred_check
      _
    $region7: #{tpu_custom_call.1} parent=1 // pred_check_branch
      %20 = sbr.rel (0) target = $region9
    $region8: #{tpu_custom_call.1} parent=1 // pred_region
      %22 = dma.done [#allocation3], 128
    $region9: #{tpu_custom_call.1} parent=1 // pred_fallthru
      _
    %v23 = vld [vmem:[#allocation2] sm:$0xff]
    %24 = vrot.lane.b32.xlu0 %v23, 1
    %v25 = vpop.permute.xlu0 %24
    %26 = vst [vmem:[#allocation5] sm:$0xff] %v25
    // Predicated region
    $region10: #{tpu_custom_call.1} parent=1 // pred_check
      _
    $region11: #{tpu_custom_call.1} parent=1 // pred_check_branch
      %28 = sbr.rel (0) target = $region13
    $region12: #{tpu_custom_call.1} parent=1 // pred_region
      %30 = vsyncadd [#allocation4], 0
      %s32 = sshll.u32 [#allocation5], 4
      %s33 = int_to_ptr.vmem [resolvable:$true] %s32
      %s34 = sshll.u32 %s1, 4
      %s35 = int_to_ptr.hbm [resolvable:$true] %s34
      %37 = dma.vmem_to_hbm [thread:$0]  %s33, 128, %s35, [#allocation4]
    $region13: #{tpu_custom_call.1} parent=1 // pred_fallthru
      _
    // Predicated region
    $region14: #{tpu_custom_call.1} parent=1 // pred_check
      _
    $region15: #{tpu_custom_call.1} parent=1 // pred_check_branch
      %39 = sbr.rel (0) target = $region17
    $region16: #{tpu_custom_call.1} parent=1 // pred_region
      %41 = dma.done [#allocation4], 128
    $region17: #{tpu_custom_call.1} parent=1 // pred_fallthru
      _
    %42 = vsyncpa [#allocation3], 1
    %43 = vsyncpa [#allocation4], 1

</llo_original>
